<compile_context>
chip_gen: v7x
topology: tpu7x:2x2x1
jax: 0.10.0
libtpu: 0.0.40
codegen_flags: <defaults>
</compile_context>

<pallas_src>
import functools

import jax
import jax.numpy as jnp
from jax.experimental import pallas as pl
from jax.experimental.pallas import tpu as pltpu


# ----------------------------------------------------------------------------
# Kernel
# ----------------------------------------------------------------------------
def _fusion_kernel(x_ref, c_ref, w1_ref, b1_ref, w2_ref, b2_ref, nd_ref,
                   bcast_ref, o_ref, *, n_cond, pack):
    """One row-tile of the fused forward on the lane-packed layout.

    Shapes (T = packed rows per tile, W = pack*hidden, L = pack*n_cond):
      x_ref, c_ref, o_ref : [T, W]
      w1_ref              : [W, pack*64]      (block-diagonal)
      b1_ref              : [1, pack*64]
      w2_ref              : [pack*64, L]      (block-diag, class-interleaved cols)
      b2_ref              : [1, L]
      nd_ref              : [L, 2W]           ([masks/K | ones], lane-placed per slot)
      bcast_ref           : [pack, L]         (slot -> interleaved-lane broadcast)
    """
    W = x_ref.shape[-1]
    P, K = pack, n_cond

    cp = c_ref[...].astype(jnp.float32)                                    # [T, W]
    # weight_classifier: Linear(H,64) -> ReLU -> Linear(64,K), block-diag packed.
    h = jnp.dot(cp, w1_ref[...], preferred_element_type=jnp.float32)       # [T, P*64]
    h = jnp.maximum(h + b1_ref[...], 0.0)
    z = jnp.dot(h, w2_ref[...], preferred_element_type=jnp.float32)        # [T, L]
    z = z + b2_ref[...]

    # Per-logical-row max over the K classes: class k of slot g lives at lane
    # k*P + g, so "element k of every slot" is the contiguous slice [kP, kP+P).
    m = z[:, :P]
    for k in range(1, K):
        m = jnp.maximum(m, z[:, k * P:(k + 1) * P])                        # [T, P]
    m_b = jnp.dot(m, bcast_ref[...], preferred_element_type=jnp.float32)   # [T, L]
    e = jnp.exp(z - m_b)                                                   # [T, L]

    # One MXU pass gives both the (1/K-scaled, mask-mixed) numerator and the
    # softmax denominator broadcast over each slot's hidden lanes.
    nd = jnp.dot(e, nd_ref[...], preferred_element_type=jnp.float32)       # [T, 2W]
    mix = nd[:, :W] * pl.reciprocal(nd[:, W:], approx=True)                # [T, W]

    o_ref[...] = (x_ref[...].astype(jnp.float32) * mix).astype(o_ref.dtype)


# ----------------------------------------------------------------------------
# Wrapper helpers
# ----------------------------------------------------------------------------
def _vmem_limit_bytes():
    """Generation-aware scoped-VMEM limit (v5e/v6e: 128 MiB phys, v7x: 64 MiB)."""
    cap = 64 * 1024 * 1024
    try:
        cap = int(pltpu.get_tpu_info().vmem_capacity_bytes)
    except Exception:
        pass
    return max(32 * 1024 * 1024, min((cap * 3) // 4, 96 * 1024 * 1024))


def _pick_tile_rows(packed_rows, lane_w, pack, budget_bytes):
    """Largest packed-row tile whose real VMEM footprint fits the budget.

    Counts double-buffered x/c/out stream blocks at the packed lane width plus
    the in-kernel f32 temps (h, logits/e/max, nd, mix, upcast x).
    """
    stream = 3 * 2 * lane_w * 4                           # x, c, out  (x2 buffers)
    temps = (pack * 64 + 4 * lane_w + 4 * 128) * 4        # h + nd/mix/x_f32 + small
    per_row = stream + temps
    t = budget_bytes // per_row
    t = min(t, 4096)                                      # ~2 MiB/stream @ 128 lanes
    t = min(t, ((packed_rows + 7) // 8) * 8)              # don't blow up tiny inputs
    return max(8, (t // 8) * 8)


def fusion_forward(x, c, w1, b1, w2, b2, masks, *, tile_rows=None):
    """Pallas implementation of Fusion.forward.

    x, c: [B, S, H]    w1: [H, 64]  b1: [64]   w2: [64, K]  b2: [K]
    masks: [K, H]      returns [B, S, H] in x.dtype.
    """
    B, S, H = x.shape
    K = masks.shape[0]
    assert c.shape == (B, S, H)
    rows = B * S

    # ---- lane-dense packing factor --------------------------------------------
    P = 128 // H if (H <= 128 and 128 % H == 0) else 1
    W = P * H
    L = P * K

    f32 = jnp.float32
    eye_p = jnp.eye(P, dtype=f32)
    # interleaved class layout: logit lane for (class k, packed slot g) = k*P + g
    j = jnp.arange(L)
    src = (j % P) * K + (j // P)
    w1_blk = jnp.kron(eye_p, w1.astype(f32))                        # [W, P*64]
    b1_blk = jnp.tile(b1.astype(f32), P).reshape(1, P * 64)
    w2_blk = jnp.kron(eye_p, w2.astype(f32))[:, src]                # [P*64, L]
    b2_blk = jnp.repeat(b2.astype(f32), P).reshape(1, L)
    masks_blk = jnp.kron(eye_p, masks.astype(f32) / K)[src, :]      # [L, W]  (1/K folded)
    ones_blk = jnp.kron(eye_p, jnp.ones((K, H), f32))[src, :]       # [L, W]
    nd_blk = jnp.concatenate([masks_blk, ones_blk], axis=1)         # [L, 2W]
    bcast = jax.nn.one_hot(j % P, P, dtype=f32).T                   # [P, L]

    # ---- tile sizing ------------------------------------------------------------
    vmem_limit = _vmem_limit_bytes()
    if tile_rows is None:
        packed_rows = pl.cdiv(rows, P)
        tile_rows = _pick_tile_rows(packed_rows, W, P, (vmem_limit * 7) // 10)
    tile_rows = max(8, (int(tile_rows) // 8) * 8)

    # ---- pack the streaming data (free, contiguous reinterpretation) ------------
    rows_pad = pl.cdiv(rows, P * tile_rows) * (P * tile_rows)
    x2 = x.reshape(rows, H)
    c2 = c.reshape(rows, H)
    if rows_pad != rows:
        pad = rows_pad - rows
        x2 = jnp.pad(x2, ((0, pad), (0, 0)))
        c2 = jnp.pad(c2, ((0, pad), (0, 0)))
    Tp = rows_pad // P
    xp = x2.reshape(Tp, W)
    cp = c2.reshape(Tp, W)

    kernel = functools.partial(_fusion_kernel, n_cond=K, pack=P)

    def const(shape):
        return pl.BlockSpec(shape, lambda i: (0, 0))

    out = pl.pallas_call(
        kernel,
        out_shape=jax.ShapeDtypeStruct((Tp, W), x.dtype),
        grid_spec=pltpu.PrefetchScalarGridSpec(
            num_scalar_prefetch=0,
            grid=(Tp // tile_rows,),
            in_specs=[
                pl.BlockSpec((tile_rows, W), lambda i: (i, 0)),   # x (lane-dense)
                pl.BlockSpec((tile_rows, W), lambda i: (i, 0)),   # c (lane-dense)
                const(w1_blk.shape),                              # resident constants
                const(b1_blk.shape),
                const(w2_blk.shape),
                const(b2_blk.shape),
                const(nd_blk.shape),
                const(bcast.shape),
            ],
            out_specs=pl.BlockSpec((tile_rows, W), lambda i: (i, 0)),
        ),
        compiler_params=pltpu.CompilerParams(
            dimension_semantics=("parallel",),
            vmem_limit_bytes=vmem_limit,
        ),
    )(xp, cp, w1_blk, b1_blk, w2_blk, b2_blk, nd_blk, bcast)

    return out.reshape(rows_pad, H)[:rows].reshape(B, S, H)


# ----------------------------------------------------------------------------
# Pure-JAX reference (mirrors the PyTorch module line by line)
# ----------------------------------------------------------------------------
def _fusion_ref(x, c, w1, b1, w2, b2, masks):
    weight = jax.nn.softmax(jax.nn.relu(c @ w1 + b1) @ w2 + b2, axis=-1)  # [B,S,K]
    xe = x[:, :, None, :]
    xe = xe * masks[None, None, :, :]
    xe = xe * weight[..., None]
    return xe.mean(axis=2)


if __name__ == "__main__":
    key = jax.random.PRNGKey(0)
    k_x, k_c, k_w1, k_b1, k_w2, k_b2, k_m = jax.random.split(key, 7)

    # small shapes consistent with the module: batch=2, seq=8, hidden=32,
    # n_conditions=5 (the PyTorch forward hard-codes expand(..., 5, ...))
    B, S, H, K = 2, 8, 32, 5

    x = jax.random.normal(k_x, (B, S, H), dtype=jnp.float32)
    c = jax.random.normal(k_c, (B, S, H), dtype=jnp.float32)
    w1 = jax.random.normal(k_w1, (H, 64), dtype=jnp.float32) * 0.1
    b1 = jax.random.normal(k_b1, (64,), dtype=jnp.float32) * 0.1
    w2 = jax.random.normal(k_w2, (64, K), dtype=jnp.float32) * 0.1
    b2 = jax.random.normal(k_b2, (K,), dtype=jnp.float32) * 0.1
    masks = jax.random.normal(k_m, (K, H), dtype=jnp.float32)

    out = fusion_forward(x, c, w1, b1, w2, b2, masks)
    jax.block_until_ready(out)

    ref = _fusion_ref(x, c, w1, b1, w2, b2, masks)
    assert out.shape == (B, S, H)
    # tolerance 1e-3: kernel uses the EUP approximate reciprocal for the softmax
    # normalisation (rel. error ~1e-4), everything else accumulates in f32.
    assert jnp.allclose(out, ref, atol=1e-3, rtol=1e-3), "mismatch vs reference"

    print("KERNEL_OK")
</pallas_src>

<mosaic_0001>
module attributes {stable_mosaic.version = 11 : i64} {
  func.func @_fusion_kernel(%arg0: i32, %arg1: memref<8x128xf32, #tpu.memory_space<vmem>>, %arg2: memref<8x128xf32, #tpu.memory_space<vmem>>, %arg3: memref<128x256xf32, #tpu.memory_space<vmem>>, %arg4: memref<1x256xf32, #tpu.memory_space<vmem>>, %arg5: memref<256x20xf32, #tpu.memory_space<vmem>>, %arg6: memref<1x20xf32, #tpu.memory_space<vmem>>, %arg7: memref<20x256xf32, #tpu.memory_space<vmem>>, %arg8: memref<4x20xf32, #tpu.memory_space<vmem>>, %arg9: memref<8x128xf32, #tpu.memory_space<vmem>>) attributes {dimension_semantics = [#tpu.dimension_semantics<parallel>], iteration_bounds = array<i64: 1>, scalar_prefetch = 0 : i64, scratch_operands = 0 : i64, tpu.core_type = #tpu.core_type<tc>, window_params = [{transform_indices = @transform_0, window_bounds = array<i64: 8, 128>}, {transform_indices = @transform_1, window_bounds = array<i64: 8, 128>}, {pipeline_mode = #tpu.pipeline_mode<synchronous>, transform_indices = @transform_2, window_bounds = array<i64: 128, 256>}, {pipeline_mode = #tpu.pipeline_mode<synchronous>, transform_indices = @transform_3, window_bounds = array<i64: 1, 256>}, {pipeline_mode = #tpu.pipeline_mode<synchronous>, transform_indices = @transform_4, window_bounds = array<i64: 256, 20>}, {pipeline_mode = #tpu.pipeline_mode<synchronous>, transform_indices = @transform_5, window_bounds = array<i64: 1, 20>}, {pipeline_mode = #tpu.pipeline_mode<synchronous>, transform_indices = @transform_6, window_bounds = array<i64: 20, 256>}, {pipeline_mode = #tpu.pipeline_mode<synchronous>, transform_indices = @transform_7, window_bounds = array<i64: 4, 20>}, {transform_indices = @transform_8, window_bounds = array<i64: 8, 128>}]} {
    %c0 = arith.constant 0 : index
    %c0_0 = arith.constant 0 : index
    %0 = vector.load %arg2[%c0, %c0_0] : memref<8x128xf32, #tpu.memory_space<vmem>>, vector<8x128xf32>
    %c0_1 = arith.constant 0 : index
    %c0_2 = arith.constant 0 : index
    %1 = vector.load %arg3[%c0_1, %c0_2] : memref<128x256xf32, #tpu.memory_space<vmem>>, vector<128x256xf32>
    %cst = arith.constant dense<0.000000e+00> : vector<8x256xf32>
    %2 = tpu.matmul %0, %1, %cst {dimension_numbers = #tpu.dot_dimension_numbers<[1], [0], [0], [1], [0, 0, 1, 1], [], []>} : vector<8x128xf32>, vector<128x256xf32>, vector<8x256xf32> -> vector<8x256xf32>
    %c0_3 = arith.constant 0 : index
    %c0_4 = arith.constant 0 : index
    %3 = vector.load %arg4[%c0_3, %c0_4] : memref<1x256xf32, #tpu.memory_space<vmem>>, vector<1x256xf32>
    %4 = vector.broadcast %3 : vector<1x256xf32> to vector<8x256xf32>
    %5 = arith.addf %2, %4 : vector<8x256xf32>
    %cst_5 = arith.constant 0.000000e+00 : f32
    %6 = vector.broadcast %cst_5 : f32 to vector<8x256xf32>
    %7 = arith.maximumf %5, %6 : vector<8x256xf32>
    %c0_6 = arith.constant 0 : index
    %c0_7 = arith.constant 0 : index
    %8 = vector.load %arg5[%c0_6, %c0_7] : memref<256x20xf32, #tpu.memory_space<vmem>>, vector<256x20xf32>
    %cst_8 = arith.constant dense<0.000000e+00> : vector<8x20xf32>
    %9 = tpu.matmul %7, %8, %cst_8 {dimension_numbers = #tpu.dot_dimension_numbers<[1], [0], [0], [1], [0, 0, 1, 1], [], []>} : vector<8x256xf32>, vector<256x20xf32>, vector<8x20xf32> -> vector<8x20xf32>
    %c0_9 = arith.constant 0 : index
    %c0_10 = arith.constant 0 : index
    %10 = vector.load %arg6[%c0_9, %c0_10] : memref<1x20xf32, #tpu.memory_space<vmem>>, vector<1x20xf32>
    %11 = vector.broadcast %10 : vector<1x20xf32> to vector<8x20xf32>
    %12 = arith.addf %9, %11 : vector<8x20xf32>
    %13 = vector.extract_strided_slice %12 {offsets = [0, 0], sizes = [8, 4], strides = [1, 1]} : vector<8x20xf32> to vector<8x4xf32>
    %14 = vector.extract_strided_slice %12 {offsets = [0, 4], sizes = [8, 4], strides = [1, 1]} : vector<8x20xf32> to vector<8x4xf32>
    %15 = arith.maximumf %13, %14 : vector<8x4xf32>
    %16 = vector.extract_strided_slice %12 {offsets = [0, 8], sizes = [8, 4], strides = [1, 1]} : vector<8x20xf32> to vector<8x4xf32>
    %17 = arith.maximumf %15, %16 : vector<8x4xf32>
    %18 = vector.extract_strided_slice %12 {offsets = [0, 12], sizes = [8, 4], strides = [1, 1]} : vector<8x20xf32> to vector<8x4xf32>
    %19 = arith.maximumf %17, %18 : vector<8x4xf32>
    %20 = vector.extract_strided_slice %12 {offsets = [0, 16], sizes = [8, 4], strides = [1, 1]} : vector<8x20xf32> to vector<8x4xf32>
    %21 = arith.maximumf %19, %20 : vector<8x4xf32>
    %c0_11 = arith.constant 0 : index
    %c0_12 = arith.constant 0 : index
    %22 = vector.load %arg8[%c0_11, %c0_12] : memref<4x20xf32, #tpu.memory_space<vmem>>, vector<4x20xf32>
    %cst_13 = arith.constant dense<0.000000e+00> : vector<8x20xf32>
    %23 = tpu.matmul %21, %22, %cst_13 {dimension_numbers = #tpu.dot_dimension_numbers<[1], [0], [0], [1], [0, 0, 1, 1], [], []>} : vector<8x4xf32>, vector<4x20xf32>, vector<8x20xf32> -> vector<8x20xf32>
    %24 = arith.subf %12, %23 : vector<8x20xf32>
    %25 = math.exp %24 : vector<8x20xf32>
    %c0_14 = arith.constant 0 : index
    %c0_15 = arith.constant 0 : index
    %26 = vector.load %arg7[%c0_14, %c0_15] : memref<20x256xf32, #tpu.memory_space<vmem>>, vector<20x256xf32>
    %cst_16 = arith.constant dense<0.000000e+00> : vector<8x256xf32>
    %27 = tpu.matmul %25, %26, %cst_16 {dimension_numbers = #tpu.dot_dimension_numbers<[1], [0], [0], [1], [0, 0, 1, 1], [], []>} : vector<8x20xf32>, vector<20x256xf32>, vector<8x256xf32> -> vector<8x256xf32>
    %28 = vector.extract_strided_slice %27 {offsets = [0, 0], sizes = [8, 128], strides = [1, 1]} : vector<8x256xf32> to vector<8x128xf32>
    %29 = vector.extract_strided_slice %27 {offsets = [0, 128], sizes = [8, 128], strides = [1, 1]} : vector<8x256xf32> to vector<8x128xf32>
    %30 = tpu.reciprocal %29 {approx = true} : vector<8x128xf32> -> vector<8x128xf32>
    %31 = arith.mulf %28, %30 : vector<8x128xf32>
    %c0_17 = arith.constant 0 : index
    %c0_18 = arith.constant 0 : index
    %32 = vector.load %arg1[%c0_17, %c0_18] : memref<8x128xf32, #tpu.memory_space<vmem>>, vector<8x128xf32>
    %33 = arith.mulf %32, %31 : vector<8x128xf32>
    %c0_19 = arith.constant 0 : index
    %c0_20 = arith.constant 0 : index
    %34 = vector.load %arg9[%c0_19, %c0_20] : memref<8x128xf32, #tpu.memory_space<vmem>>, vector<8x128xf32>
    tpu.vector_store %arg9[%c0_19, %c0_20], %33 {strides = array<i32>} : memref<8x128xf32, #tpu.memory_space<vmem>>, vector<8x128xf32>,
    return
  }
  func.func @transform_0(%arg0: i32) -> (i32, i32) {
    %c0_i32 = arith.constant 0 : i32
    %c0_i32_0 = arith.constant 0 : i32
    return %arg0, %c0_i32 : i32, i32
  }
  func.func @transform_1(%arg0: i32) -> (i32, i32) {
    %c0_i32 = arith.constant 0 : i32
    %c0_i32_0 = arith.constant 0 : i32
    return %arg0, %c0_i32 : i32, i32
  }
  func.func @transform_2(%arg0: i32) -> (i32, i32) {
    %c0_i32 = arith.constant 0 : i32
    %c0_i32_0 = arith.constant 0 : i32
    %c0_i32_1 = arith.constant 0 : i32
    return %c0_i32, %c0_i32_0 : i32, i32
  }
  func.func @transform_3(%arg0: i32) -> (i32, i32) {
    %c0_i32 = arith.constant 0 : i32
    %c0_i32_0 = arith.constant 0 : i32
    %c0_i32_1 = arith.constant 0 : i32
    return %c0_i32, %c0_i32_0 : i32, i32
  }
  func.func @transform_4(%arg0: i32) -> (i32, i32) {
    %c0_i32 = arith.constant 0 : i32
    %c0_i32_0 = arith.constant 0 : i32
    %c0_i32_1 = arith.constant 0 : i32
    return %c0_i32, %c0_i32_0 : i32, i32
  }
  func.func @transform_5(%arg0: i32) -> (i32, i32) {
    %c0_i32 = arith.constant 0 : i32
    %c0_i32_0 = arith.constant 0 : i32
    %c0_i32_1 = arith.constant 0 : i32
    return %c0_i32, %c0_i32_0 : i32, i32
  }
  func.func @transform_6(%arg0: i32) -> (i32, i32) {
    %c0_i32 = arith.constant 0 : i32
    %c0_i32_0 = arith.constant 0 : i32
    %c0_i32_1 = arith.constant 0 : i32
    return %c0_i32, %c0_i32_0 : i32, i32
  }
  func.func @transform_7(%arg0: i32) -> (i32, i32) {
    %c0_i32 = arith.constant 0 : i32
    %c0_i32_0 = arith.constant 0 : i32
    %c0_i32_1 = arith.constant 0 : i32
    return %c0_i32, %c0_i32_0 : i32, i32
  }
  func.func @transform_8(%arg0: i32) -> (i32, i32) {
    %c0_i32 = arith.constant 0 : i32
    %c0_i32_0 = arith.constant 0 : i32
    return %arg0, %c0_i32 : i32, i32
  }
}

</mosaic_0001>

<llo_original>
// kernel: tpu_custom_call.1
$region0: #{tpu_custom_call.1}
  #allocation0 [shape = 'u32[]', space=smem, size = 0x4, offset = 0x4, fixed_abs, tag = 'smem constant byte address 0x4 - core index']
  #allocation1 [shape = 'u32[144,128]{1,0:T(1,128)}', space=vmem, size = 0x12000, scoped, tag = 'internal scratch']
  %s0 = inlined_call_operand.hbm [shape: f32[8,128], index: 0, kind: input, shape index: {}]
  %s1 = inlined_call_operand.hbm [shape: f32[8,128], index: 1, kind: input, shape index: {}]
  %s2 = inlined_call_operand.vmem [shape: f32[128,256], index: 2, kind: input, shape index: {}]
  %s3 = inlined_call_operand.vmem [shape: f32[1,256], index: 3, kind: input, shape index: {}]
  %s4 = inlined_call_operand.vmem [shape: f32[256,20], index: 4, kind: input, shape index: {}]
  %s5 = inlined_call_operand.vmem [shape: f32[1,20], index: 5, kind: input, shape index: {}]
  %s6 = inlined_call_operand.vmem [shape: f32[20,256], index: 6, kind: input, shape index: {}]
  %s7 = inlined_call_operand.vmem [shape: f32[4,20], index: 7, kind: input, shape index: {}]
  %s8 = inlined_call_operand.hbm [shape: f32[8,128], index: 8, kind: output, shape index: {}]
  %s9 = sld [smem:[#allocation0]]
  $region50: #{tpu_custom_call.1} parent=0
    _
  %s11 = ssub.s32 1, %s9
  %s12 = scalar_select 0, %s11, %s9
  $region1: #{tpu_custom_call.1} parent=0
    #allocation2 [shape = 'u8[4096]{0}', space=vmem, size = 0x1000, scoped, tag = 'input window, operand 0, single buffered']
    #allocation3 [shape = 's32[1]{0}', space=sflag, size = 0x4, scoped, tag = 'scoped memory for tpu_custom_call.1']
    #allocation4 [shape = 's32[1]{0}', space=sflag, size = 0x4, scoped, tag = 'scoped memory for tpu_custom_call.1']
    #allocation5 [shape = 'u8[4096]{0}', space=vmem, size = 0x1000, scoped, tag = 'input window, operand 1, single buffered']
    #allocation6 [shape = 's32[1]{0}', space=sflag, size = 0x4, scoped, tag = 'scoped memory for tpu_custom_call.1']
    #allocation7 [shape = 'u8[4096]{0}', space=vmem, size = 0x1000, scoped, tag = 'output window, operand 0, single buffered']
    %13 = vsyncpa [#allocation3], 0
    %14 = vsyncpa [#allocation6], 0
    %15 = vsyncpa [#allocation4], 0
    // Predicated region
    $region2: #{tpu_custom_call.1} parent=1 // pred_check
      _
    $region3: #{tpu_custom_call.1} parent=1 // pred_check_branch
      %17 = sbr.rel (0) target = $region5
    $region4: #{tpu_custom_call.1} parent=1 // pred_region
      %s19 = ssub.s32 128, 128
      %20 = vsyncadd [#allocation3], %s19
      %s22 = sshll.u32 [#allocation2], 4
      %s23 = int_to_ptr.vmem [resolvable:$true] %s22
      %25 = dma.hbm_to_vmem [thread:$0]  %s0, 128, %s23, [#allocation3]
    $region5: #{tpu_custom_call.1} parent=1 // pred_fallthru
      _
    // Predicated region
    $region6: #{tpu_custom_call.1} parent=1 // pred_check
      _
    $region7: #{tpu_custom_call.1} parent=1 // pred_check_branch
      %27 = sbr.rel (0) target = $region9
    $region8: #{tpu_custom_call.1} parent=1 // pred_region
      %s29 = ssub.s32 128, 128
      %30 = vsyncadd [#allocation6], %s29
      %s32 = sshll.u32 [#allocation5], 4
      %s33 = int_to_ptr.vmem [resolvable:$true] %s32
      %35 = dma.hbm_to_vmem [thread:$0]  %s1, 128, %s33, [#allocation6]
    $region9: #{tpu_custom_call.1} parent=1 // pred_fallthru
      _
    // Predicated region
    $region10: #{tpu_custom_call.1} parent=1 // pred_check
      _
    $region11: #{tpu_custom_call.1} parent=1 // pred_check_branch
      %37 = sbr.rel (0) target = $region13
    $region12: #{tpu_custom_call.1} parent=1 // pred_region
      _
    $region13: #{tpu_custom_call.1} parent=1 // pred_fallthru
      _
    // Predicated region
    $region14: #{tpu_custom_call.1} parent=1 // pred_check
      _
    $region15: #{tpu_custom_call.1} parent=1 // pred_check_branch
      %39 = sbr.rel (0) target = $region17
    $region16: #{tpu_custom_call.1} parent=1 // pred_region
      _
    $region17: #{tpu_custom_call.1} parent=1 // pred_fallthru
      _
    // Predicated region
    $region18: #{tpu_custom_call.1} parent=1 // pred_check
      _
    $region19: #{tpu_custom_call.1} parent=1 // pred_check_branch
      %41 = sbr.rel (0) target = $region21
    $region20: #{tpu_custom_call.1} parent=1 // pred_region
      _
    $region21: #{tpu_custom_call.1} parent=1 // pred_fallthru
      _
    // Predicated region
    $region22: #{tpu_custom_call.1} parent=1 // pred_check
      _
    $region23: #{tpu_custom_call.1} parent=1 // pred_check_branch
      %43 = sbr.rel (0) target = $region25
    $region24: #{tpu_custom_call.1} parent=1 // pred_region
      _
    $region25: #{tpu_custom_call.1} parent=1 // pred_fallthru
      _
    // Predicated region
    $region26: #{tpu_custom_call.1} parent=1 // pred_check
      _
    $region27: #{tpu_custom_call.1} parent=1 // pred_check_branch
      %45 = sbr.rel (0) target = $region29
    $region28: #{tpu_custom_call.1} parent=1 // pred_region
      _
    $region29: #{tpu_custom_call.1} parent=1 // pred_fallthru
      _
    // Predicated region
    $region30: #{tpu_custom_call.1} parent=1 // pred_check
      _
    $region31: #{tpu_custom_call.1} parent=1 // pred_check_branch
      %47 = sbr.rel (0) target = $region33
    $region32: #{tpu_custom_call.1} parent=1 // pred_region
      _
    $region33: #{tpu_custom_call.1} parent=1 // pred_fallthru
      _
    // Predicated region
    $region34: #{tpu_custom_call.1} parent=1 // pred_check
      _
    $region35: #{tpu_custom_call.1} parent=1 // pred_check_branch
      %49 = sbr.rel (0) target = $region37
    $region36: #{tpu_custom_call.1} parent=1 // pred_region
      %50 = dma.done [#allocation3], 128
    $region37: #{tpu_custom_call.1} parent=1 // pred_fallthru
      _
    // Predicated region
    $region38: #{tpu_custom_call.1} parent=1 // pred_check
      _
    $region39: #{tpu_custom_call.1} parent=1 // pred_check_branch
      %52 = sbr.rel (0) target = $region41
    $region40: #{tpu_custom_call.1} parent=1 // pred_region
      %53 = dma.done [#allocation6], 128
    $region41: #{tpu_custom_call.1} parent=1 // pred_fallthru
      _
    %v54 = vld [vmem:[#allocation5] sm:$0xff]
    %v55 = vld [vmem:[%s2] sm:$0xff]
    %v56 = vld [vmem:[%s2 + $0x8] sm:$0xff]
    %v57 = vld [vmem:[%s2 + $0x10] sm:$0xff]
    %v58 = vld [vmem:[%s2 + $0x18] sm:$0xff]
    %v59 = vld [vmem:[%s2 + $0x20] sm:$0xff]
    %v60 = vld [vmem:[%s2 + $0x28] sm:$0xff]
    %v61 = vld [vmem:[%s2 + $0x30] sm:$0xff]
    %v62 = vld [vmem:[%s2 + $0x38] sm:$0xff]
    %v63 = vld [vmem:[%s2 + $0x40] sm:$0xff]
    %v64 = vld [vmem:[%s2 + $0x48] sm:$0xff]
    %v65 = vld [vmem:[%s2 + $0x50] sm:$0xff]
    %v66 = vld [vmem:[%s2 + $0x58] sm:$0xff]
    %v67 = vld [vmem:[%s2 + $0x60] sm:$0xff]
    %v68 = vld [vmem:[%s2 + $0x68] sm:$0xff]
    %v69 = vld [vmem:[%s2 + $0x70] sm:$0xff]
    %v70 = vld [vmem:[%s2 + $0x78] sm:$0xff]
    %v71 = vld [vmem:[%s2 + $0x80] sm:$0xff]
    %v72 = vld [vmem:[%s2 + $0x88] sm:$0xff]
    %v73 = vld [vmem:[%s2 + $0x90] sm:$0xff]
    %v74 = vld [vmem:[%s2 + $0x98] sm:$0xff]
    %v75 = vld [vmem:[%s2 + $0xa0] sm:$0xff]
    %v76 = vld [vmem:[%s2 + $0xa8] sm:$0xff]
    %v77 = vld [vmem:[%s2 + $0xb0] sm:$0xff]
    %v78 = vld [vmem:[%s2 + $0xb8] sm:$0xff]
    %v79 = vld [vmem:[%s2 + $0xc0] sm:$0xff]
    %v80 = vld [vmem:[%s2 + $0xc8] sm:$0xff]
    %v81 = vld [vmem:[%s2 + $0xd0] sm:$0xff]
    %v82 = vld [vmem:[%s2 + $0xd8] sm:$0xff]
    %v83 = vld [vmem:[%s2 + $0xe0] sm:$0xff]
    %v84 = vld [vmem:[%s2 + $0xe8] sm:$0xff]
    %v85 = vld [vmem:[%s2 + $0xf0] sm:$0xff]
    %v86 = vld [vmem:[%s2 + $0xf8] sm:$0xff]
    %v87 = vld [vmem:[%s3] sm:$0x3]
    %v89 = vlaneseq
    %v90 = vshrl.u32 %v89, 7
    %v91 = vsub.s32 0, %v90
    %v92 = vrot.slane %v87, %v91
    %v93 = vlaneseq
    %v94 = vshrl.u32 %v93, 7
    %v95 = vsub.s32 1, %v94
    %v96 = vrot.slane %v87, %v95
    %99 = vmatprep.subr.mxu0 %v56
    %100 = vmatpush1.msra.mxu0 %v55
    %101 = vmatprep.subr.mxu0 %v58
    %102 = vmatpush1.msra.mxu0 %v57
    %103 = vmatprep.subr.mxu0 %v60
    %104 = vmatpush1.msra.mxu0 %v59
    %105 = vmatprep.subr.mxu0 %v62
    %106 = vmatpush1.msra.mxu0 %v61
    %107 = vmatprep.subr.mxu0 %v64
    %108 = vmatpush1.msra.mxu0 %v63
    %109 = vmatprep.subr.mxu0 %v66
    %110 = vmatpush1.msra.mxu0 %v65
    %111 = vmatprep.subr.mxu0 %v68
    %112 = vmatpush1.msra.mxu0 %v67
    %113 = vmatprep.subr.mxu0 %v70
    %114 = vmatpush1.msra.mxu0 %v69
    %115 = vmatprep.subr.mxu0 %v72
    %116 = vmatpush1.msra.mxu0 %v71
    %117 = vmatprep.subr.mxu0 %v74
    %118 = vmatpush1.msra.mxu0 %v73
    %119 = vmatprep.subr.mxu0 %v76
    %120 = vmatpush1.msra.mxu0 %v75
    %121 = vmatprep.subr.mxu0 %v78
    %122 = vmatpush1.msra.mxu0 %v77
    %123 = vmatprep.subr.mxu0 %v80
    %124 = vmatpush1.msra.mxu0 %v79
    %125 = vmatprep.subr.mxu0 %v82
    %126 = vmatpush1.msra.mxu0 %v81
    %127 = vmatprep.subr.mxu0 %v84
    %128 = vmatpush1.msra.mxu0 %v83
    %129 = vmatprep.subr.mxu0 %v86
    %130 = vmatpush1.msra.mxu0 %v85
    %131 = vmatprep.subr.mxu0 0.0
    %132 = vmatpush1.msra.mxu0 0.0
    %133 = vmatprep.subr.mxu0 0.0
    %134 = vmatpush1.msra.mxu0 0.0
    %135 = vmatprep.subr.mxu0 0.0
    %136 = vmatpush1.msra.mxu0 0.0
    %137 = vmatprep.subr.mxu0 0.0
    %138 = vmatpush1.msra.mxu0 0.0
    %139 = vmatprep.subr.mxu0 0.0
    %140 = vmatpush1.msra.mxu0 0.0
    %141 = vmatprep.subr.mxu0 0.0
    %142 = vmatpush1.msra.mxu0 0.0
    %143 = vmatprep.subr.mxu0 0.0
    %144 = vmatpush1.msra.mxu0 0.0
    %145 = vmatprep.subr.mxu0 0.0
    %146 = vmatpush1.msra.mxu0 0.0
    %147 = vmatprep.subr.mxu0 0.0
    %148 = vmatpush1.msra.mxu0 0.0
    %149 = vmatprep.subr.mxu0 0.0
    %150 = vmatpush1.msra.mxu0 0.0
    %151 = vmatprep.subr.mxu0 0.0
    %152 = vmatpush1.msra.mxu0 0.0
    %153 = vmatprep.subr.mxu0 0.0
    %154 = vmatpush1.msra.mxu0 0.0
    %155 = vmatprep.subr.mxu0 0.0
    %156 = vmatpush1.msra.mxu0 0.0
    %157 = vmatprep.subr.mxu0 0.0
    %158 = vmatpush1.msra.mxu0 0.0
    %159 = vmatprep.subr.mxu0 0.0
    %160 = vmatpush1.msra.mxu0 0.0
    %161 = vmatprep.subr.mxu0 0.0
    %162 = vmatpush1.msra.mxu0 0.0
    %163 = vmatprep.mubr.f32.mxu0 0.0
    %164 = vmatmul.mubr.f32.gmra.mrb[0].mxu0 %v54
    %v165 = vpop.f32.mrb[0].mxu0
    %v166 = vadd.f32 %v92, %v165
    %v167 = vpop.f32.mrb[0].mxu0
    %v168 = vadd.f32 %v96, %v167
    %169 = vdwg.mxu0
    %v170 = vmax.f32 %v166, 0.0
    %v171 = vmax.f32 %v168, 0.0
    %v172 = vld [vmem:[%s4] sm:$0xff]
    %v173 = vld [vmem:[%s4 + $0x8] sm:$0xff]
    %v174 = vld [vmem:[%s4 + $0x10] sm:$0xff]
    %v175 = vld [vmem:[%s4 + $0x18] sm:$0xff]
    %v176 = vld [vmem:[%s4 + $0x20] sm:$0xff]
    %v177 = vld [vmem:[%s4 + $0x28] sm:$0xff]
    %v178 = vld [vmem:[%s4 + $0x30] sm:$0xff]
    %v179 = vld [vmem:[%s4 + $0x38] sm:$0xff]
    %v180 = vld [vmem:[%s4 + $0x40] sm:$0xff]
    %v181 = vld [vmem:[%s4 + $0x48] sm:$0xff]
    %v182 = vld [vmem:[%s4 + $0x50] sm:$0xff]
    %v183 = vld [vmem:[%s4 + $0x58] sm:$0xff]
    %v184 = vld [vmem:[%s4 + $0x60] sm:$0xff]
    %v185 = vld [vmem:[%s4 + $0x68] sm:$0xff]
    %v186 = vld [vmem:[%s4 + $0x70] sm:$0xff]
    %v187 = vld [vmem:[%s4 + $0x78] sm:$0xff]
    %v188 = vld [vmem:[%s4 + $0x80] sm:$0xff]
    %v189 = vld [vmem:[%s4 + $0x88] sm:$0xff]
    %v190 = vld [vmem:[%s4 + $0x90] sm:$0xff]
    %v191 = vld [vmem:[%s4 + $0x98] sm:$0xff]
    %v192 = vld [vmem:[%s4 + $0xa0] sm:$0xff]
    %v193 = vld [vmem:[%s4 + $0xa8] sm:$0xff]
    %v194 = vld [vmem:[%s4 + $0xb0] sm:$0xff]
    %v195 = vld [vmem:[%s4 + $0xb8] sm:$0xff]
    %v196 = vld [vmem:[%s4 + $0xc0] sm:$0xff]
    %v197 = vld [vmem:[%s4 + $0xc8] sm:$0xff]
    %v198 = vld [vmem:[%s4 + $0xd0] sm:$0xff]
    %v199 = vld [vmem:[%s4 + $0xd8] sm:$0xff]
    %v200 = vld [vmem:[%s4 + $0xe0] sm:$0xff]
    %v201 = vld [vmem:[%s4 + $0xe8] sm:$0xff]
    %v202 = vld [vmem:[%s4 + $0xf0] sm:$0xff]
    %v203 = vld [vmem:[%s4 + $0xf8] sm:$0xff]
    %v204 = vld [vmem:[%s5] sm:$0x1]
    %v206 = vlaneseq
    %v207 = vshrl.u32 %v206, 7
    %v208 = vsub.s32 0, %v207
    %v209 = vrot.slane %v204, %v208
    %211 = vmatprep.subr.mxu0 0.0
    %212 = vmatpush1.msra.mxu0 %v172
    %213 = vmatprep.subr.mxu0 0.0
    %214 = vmatpush1.msra.mxu0 %v173
    %215 = vmatprep.subr.mxu0 0.0
    %216 = vmatpush1.msra.mxu0 %v174
    %217 = vmatprep.subr.mxu0 0.0
    %218 = vmatpush1.msra.mxu0 %v175
    %219 = vmatprep.subr.mxu0 0.0
    %220 = vmatpush1.msra.mxu0 %v176
    %221 = vmatprep.subr.mxu0 0.0
    %222 = vmatpush1.msra.mxu0 %v177
    %223 = vmatprep.subr.mxu0 0.0
    %224 = vmatpush1.msra.mxu0 %v178
    %225 = vmatprep.subr.mxu0 0.0
    %226 = vmatpush1.msra.mxu0 %v179
    %227 = vmatprep.subr.mxu0 0.0
    %228 = vmatpush1.msra.mxu0 %v180
    %229 = vmatprep.subr.mxu0 0.0
    %230 = vmatpush1.msra.mxu0 %v181
    %231 = vmatprep.subr.mxu0 0.0
    %232 = vmatpush1.msra.mxu0 %v182
    %233 = vmatprep.subr.mxu0 0.0
    %234 = vmatpush1.msra.mxu0 %v183
    %235 = vmatprep.subr.mxu0 0.0
    %236 = vmatpush1.msra.mxu0 %v184
    %237 = vmatprep.subr.mxu0 0.0
    %238 = vmatpush1.msra.mxu0 %v185
    %239 = vmatprep.subr.mxu0 0.0
    %240 = vmatpush1.msra.mxu0 %v186
    %241 = vmatprep.subr.mxu0 0.0
    %242 = vmatpush1.msra.mxu0 %v187
    %243 = vmatprep.subr.mxu0 0.0
    %244 = vmatpush1.msra.mxu0 %v188
    %245 = vmatprep.subr.mxu0 0.0
    %246 = vmatpush1.msra.mxu0 %v189
    %247 = vmatprep.subr.mxu0 0.0
    %248 = vmatpush1.msra.mxu0 %v190
    %249 = vmatprep.subr.mxu0 0.0
    %250 = vmatpush1.msra.mxu0 %v191
    %251 = vmatprep.subr.mxu0 0.0
    %252 = vmatpush1.msra.mxu0 %v192
    %253 = vmatprep.subr.mxu0 0.0
    %254 = vmatpush1.msra.mxu0 %v193
    %255 = vmatprep.subr.mxu0 0.0
    %256 = vmatpush1.msra.mxu0 %v194
    %257 = vmatprep.subr.mxu0 0.0
    %258 = vmatpush1.msra.mxu0 %v195
    %259 = vmatprep.subr.mxu0 0.0
    %260 = vmatpush1.msra.mxu0 %v196
    %261 = vmatprep.subr.mxu0 0.0
    %262 = vmatpush1.msra.mxu0 %v197
    %263 = vmatprep.subr.mxu0 0.0
    %264 = vmatpush1.msra.mxu0 %v198
    %265 = vmatprep.subr.mxu0 0.0
    %266 = vmatpush1.msra.mxu0 %v199
    %267 = vmatprep.subr.mxu0 0.0
    %268 = vmatpush1.msra.mxu0 %v200
    %269 = vmatprep.subr.mxu0 0.0
    %270 = vmatpush1.msra.mxu0 %v201
    %271 = vmatprep.subr.mxu0 0.0
    %272 = vmatpush1.msra.mxu0 %v202
    %273 = vmatprep.subr.mxu0 0.0
    %274 = vmatpush1.msra.mxu0 %v203
    %275 = vmatprep.mubr.f32.mxu0 %v171
    %276 = vmatmul.mubr.f32.gmra.mrb[0].mxu0 %v170
    %v277 = vpop.f32.mrb[0].mxu0
    %v278 = vadd.f32 %v209, %v277
    %v279 = vpop.f32.mrb[0].mxu0
    %280 = vdwg.mxu0
    %282 = vrot.lane.b32.xlu0 %v278, 124
    %v283 = vpop.permute.xlu0 %282
    %v285 = vmax.f32 %v278, %v283
    %286 = vrot.lane.b32.xlu0 %v278, 120
    %v287 = vpop.permute.xlu0 %286
    %v289 = vmax.f32 %v285, %v287
    %290 = vrot.lane.b32.xlu0 %v278, 116
    %v291 = vpop.permute.xlu0 %290
    %v293 = vmax.f32 %v289, %v291
    %294 = vrot.lane.b32.xlu0 %v278, 112
    %v295 = vpop.permute.xlu0 %294
    %v297 = vmax.f32 %v293, %v295
    %v298 = vld [vmem:[%s7] sm:$0xf]
    %vm299 = vcmask 31744
    %v301 = vsel %vm299, %v297, 0
    %vm303 = vcmask 1043456
    %v305 = vsel %vm303, %v298, 0
    %307 = vmatprep.subr.mxu0 0.0
    %308 = vmatpush1.msra.mxu0 %v305
    %309 = vmatprep.subr.mxu0 0.0
    %310 = vmatpush1.msra.mxu0 0.0
    %311 = vmatprep.subr.mxu0 0.0
    %312 = vmatpush1.msra.mxu0 0.0
    %313 = vmatprep.subr.mxu0 0.0
    %314 = vmatpush1.msra.mxu0 0.0
    %315 = vmatprep.subr.mxu0 0.0
    %316 = vmatpush1.msra.mxu0 0.0
    %317 = vmatprep.subr.mxu0 0.0
    %318 = vmatpush1.msra.mxu0 0.0
    %319 = vmatprep.subr.mxu0 0.0
    %320 = vmatpush1.msra.mxu0 0.0
    %321 = vmatprep.subr.mxu0 0.0
    %322 = vmatpush1.msra.mxu0 0.0
    %323 = vmatprep.subr.mxu0 0.0
    %324 = vmatpush1.msra.mxu0 0.0
    %325 = vmatprep.subr.mxu0 0.0
    %326 = vmatpush1.msra.mxu0 0.0
    %327 = vmatprep.subr.mxu0 0.0
    %328 = vmatpush1.msra.mxu0 0.0
    %329 = vmatprep.subr.mxu0 0.0
    %330 = vmatpush1.msra.mxu0 0.0
    %331 = vmatprep.subr.mxu0 0.0
    %332 = vmatpush1.msra.mxu0 0.0
    %333 = vmatprep.subr.mxu0 0.0
    %334 = vmatpush1.msra.mxu0 0.0
    %335 = vmatprep.subr.mxu0 0.0
    %336 = vmatpush1.msra.mxu0 0.0
    %337 = vmatprep.subr.mxu0 0.0
    %338 = vmatpush1.msra.mxu0 0.0
    %339 = vmatprep.subr.mxu0 0.0
    %340 = vmatpush1.msra.mxu0 0.0
    %341 = vmatprep.subr.mxu0 0.0
    %342 = vmatpush1.msra.mxu0 0.0
    %343 = vmatprep.subr.mxu0 0.0
    %344 = vmatpush1.msra.mxu0 0.0
    %345 = vmatprep.subr.mxu0 0.0
    %346 = vmatpush1.msra.mxu0 0.0
    %347 = vmatprep.subr.mxu0 0.0
    %348 = vmatpush1.msra.mxu0 0.0
    %349 = vmatprep.subr.mxu0 0.0
    %350 = vmatpush1.msra.mxu0 0.0
    %351 = vmatprep.subr.mxu0 0.0
    %352 = vmatpush1.msra.mxu0 0.0
    %353 = vmatprep.subr.mxu0 0.0
    %354 = vmatpush1.msra.mxu0 0.0
    %355 = vmatprep.subr.mxu0 0.0
    %356 = vmatpush1.msra.mxu0 0.0
    %357 = vmatprep.subr.mxu0 0.0
    %358 = vmatpush1.msra.mxu0 0.0
    %359 = vmatprep.subr.mxu0 0.0
    %360 = vmatpush1.msra.mxu0 0.0
    %361 = vmatprep.subr.mxu0 0.0
    %362 = vmatpush1.msra.mxu0 0.0
    %363 = vmatprep.subr.mxu0 0.0
    %364 = vmatpush1.msra.mxu0 0.0
    %365 = vmatprep.subr.mxu0 0.0
    %366 = vmatpush1.msra.mxu0 0.0
    %367 = vmatprep.subr.mxu0 0.0
    %368 = vmatpush1.msra.mxu0 0.0
    %369 = vmatprep.subr.mxu0 0.0
    %370 = vmatpush1.msra.mxu0 0.0
    %371 = vmatprep.mubr.f32.mxu0 0.0
    %372 = vmatmul.mubr.f32.gmra.mrb[0].mxu0 %v301
    %v373 = vpop.f32.mrb[0].mxu0
    %v374 = vadd.f32 0.0, %v373
    %v375 = vpop.f32.mrb[0].mxu0
    %376 = vdwg.mxu0
    %v377 = vsub.f32 %v278, %v374
    %v378 = vmul.f32 %v377, 1.442695
    %v379 = vpow.pop %v378
    %v380 = vld [vmem:[%s6] sm:$0xff]
    %v381 = vld [vmem:[%s6 + $0x8] sm:$0xff]
    %v382 = vld [vmem:[%s6 + $0x10] sm:$0xff]
    %v383 = vld [vmem:[%s6 + $0x18] sm:$0xff]
    %v384 = vld [vmem:[%s6 + $0x20] sm:$0xf]
    %v385 = vld [vmem:[%s6 + $0x28] sm:$0xf]
    %vm386 = vcmask 162816
    %v388 = vsel %vm386, %v379, 0
    %v391 = vsel %vm303, %v384, 0
    %v394 = vsel %vm303, %v385, 0
    %396 = vmatprep.subr.mxu0 %v381
    %397 = vmatpush1.msra.mxu0 %v380
    %398 = vmatprep.subr.mxu0 %v383
    %399 = vmatpush1.msra.mxu0 %v382
    %400 = vmatprep.subr.mxu0 %v394
    %401 = vmatpush1.msra.mxu0 %v391
    %402 = vmatprep.subr.mxu0 0.0
    %403 = vmatpush1.msra.mxu0 0.0
    %404 = vmatprep.subr.mxu0 0.0
    %405 = vmatpush1.msra.mxu0 0.0
    %406 = vmatprep.subr.mxu0 0.0
    %407 = vmatpush1.msra.mxu0 0.0
    %408 = vmatprep.subr.mxu0 0.0
    %409 = vmatpush1.msra.mxu0 0.0
    %410 = vmatprep.subr.mxu0 0.0
    %411 = vmatpush1.msra.mxu0 0.0
    %412 = vmatprep.subr.mxu0 0.0
    %413 = vmatpush1.msra.mxu0 0.0
    %414 = vmatprep.subr.mxu0 0.0
    %415 = vmatpush1.msra.mxu0 0.0
    %416 = vmatprep.subr.mxu0 0.0
    %417 = vmatpush1.msra.mxu0 0.0
    %418 = vmatprep.subr.mxu0 0.0
    %419 = vmatpush1.msra.mxu0 0.0
    %420 = vmatprep.subr.mxu0 0.0
    %421 = vmatpush1.msra.mxu0 0.0
    %422 = vmatprep.subr.mxu0 0.0
    %423 = vmatpush1.msra.mxu0 0.0
    %424 = vmatprep.subr.mxu0 0.0
    %425 = vmatpush1.msra.mxu0 0.0
    %426 = vmatprep.subr.mxu0 0.0
    %427 = vmatpush1.msra.mxu0 0.0
    %428 = vmatprep.subr.mxu0 0.0
    %429 = vmatpush1.msra.mxu0 0.0
    %430 = vmatprep.subr.mxu0 0.0
    %431 = vmatpush1.msra.mxu0 0.0
    %432 = vmatprep.subr.mxu0 0.0
    %433 = vmatpush1.msra.mxu0 0.0
    %434 = vmatprep.subr.mxu0 0.0
    %435 = vmatpush1.msra.mxu0 0.0
    %436 = vmatprep.subr.mxu0 0.0
    %437 = vmatpush1.msra.mxu0 0.0
    %438 = vmatprep.subr.mxu0 0.0
    %439 = vmatpush1.msra.mxu0 0.0
    %440 = vmatprep.subr.mxu0 0.0
    %441 = vmatpush1.msra.mxu0 0.0
    %442 = vmatprep.subr.mxu0 0.0
    %443 = vmatpush1.msra.mxu0 0.0
    %444 = vmatprep.subr.mxu0 0.0
    %445 = vmatpush1.msra.mxu0 0.0
    %446 = vmatprep.subr.mxu0 0.0
    %447 = vmatpush1.msra.mxu0 0.0
    %448 = vmatprep.subr.mxu0 0.0
    %449 = vmatpush1.msra.mxu0 0.0
    %450 = vmatprep.subr.mxu0 0.0
    %451 = vmatpush1.msra.mxu0 0.0
    %452 = vmatprep.subr.mxu0 0.0
    %453 = vmatpush1.msra.mxu0 0.0
    %454 = vmatprep.subr.mxu0 0.0
    %455 = vmatpush1.msra.mxu0 0.0
    %456 = vmatprep.subr.mxu0 0.0
    %457 = vmatpush1.msra.mxu0 0.0
    %458 = vmatprep.subr.mxu0 0.0
    %459 = vmatpush1.msra.mxu0 0.0
    %460 = vmatprep.mubr.f32.mxu0 0.0
    %461 = vmatmul.mubr.f32.gmra.mrb[0].mxu0 %v388
    %v462 = vpop.f32.mrb[0].mxu0
    %v463 = vadd.f32 0.0, %v462
    %v464 = vpop.f32.mrb[0].mxu0
    %v465 = vadd.f32 0.0, %v464
    %466 = vdwg.mxu0
    %v467 = vrcp.pop %v465
    %v468 = vmul.f32 %v463, %v467
    %v469 = vld [vmem:[#allocation2] sm:$0xff]
    %v470 = vmul.f32 %v469, %v468
    %471 = vst [vmem:[#allocation7] sm:$0xff] %v470
    // Predicated region
    $region42: #{tpu_custom_call.1} parent=1 // pred_check
      _
    $region43: #{tpu_custom_call.1} parent=1 // pred_check_branch
      %473 = sbr.rel (0) target = $region45
    $region44: #{tpu_custom_call.1} parent=1 // pred_region
      %s475 = ssub.s32 128, 128
      %476 = vsyncadd [#allocation4], %s475
      %s478 = sshll.u32 [#allocation7], 4
      %s479 = int_to_ptr.vmem [resolvable:$true] %s478
      %481 = dma.vmem_to_hbm [thread:$0]  %s479, 128, %s8, [#allocation4]
    $region45: #{tpu_custom_call.1} parent=1 // pred_fallthru
      _
    // Predicated region
    $region46: #{tpu_custom_call.1} parent=1 // pred_check
      _
    $region47: #{tpu_custom_call.1} parent=1 // pred_check_branch
      %483 = sbr.rel (0) target = $region49
    $region48: #{tpu_custom_call.1} parent=1 // pred_region
      %484 = dma.done [#allocation4], 128
    $region49: #{tpu_custom_call.1} parent=1 // pred_fallthru
      _
    %485 = vsyncpa [#allocation3], 1
    %486 = vsyncpa [#allocation6], 1
    %487 = vsyncpa [#allocation4], 1

</llo_original>
